<compile_context>
chip_gen: v7x
topology: tpu7x:2x2x1
jax: 0.10.0
libtpu: 0.0.40
codegen_flags: <defaults>
</compile_context>

<pallas_src>
import jax
import jax.numpy as jnp
from jax import lax
from jax.experimental import pallas as pl
from jax.experimental.pallas import tpu as pltpu

N_BINS = 128
P = 4                       # parameters: [mu, tes, jes, les]
N_UNIQ = P * (P + 1) // 2   # 10 unique Hessian entries (j <= k)

# Upper-triangular (j <= k) pair ordering and the mirror map back to (4, 4).
_PAIRS = tuple((j, k) for j in range(P) for k in range(j, P))
_J_IDX = tuple(p[0] for p in _PAIRS)
_K_IDX = tuple(p[1] for p in _PAIRS)
_MIRROR = [[0] * P for _ in range(P)]
for _idx, (_j, _k) in enumerate(_PAIRS):
    _MIRROR[_j][_k] = _idx
    _MIRROR[_k][_j] = _idx

# Synthetic "HiggsConfig" calibrated nuisance constraints (deterministic).
TES_LOC, TES_STD = 1.0, 0.03
JES_LOC, JES_STD = 1.0, 0.03
LES_LOC, LES_STD = 1.0, 0.02

# Packed-slab row layout (every row lane-dense over the bin axis):
#   row 0              : lam  (expected counts, Poisson rate)
#   row 1              : n    (observed / Asimov counts)
#   rows 2  .. 11      : J_a  = dlam/dtheta_j   for the 10 unique (j<=k) pairs
#   rows 12 .. 21      : J_b  = dlam/dtheta_k
#   rows 22 .. 31      : Hu   = d2lam/dtheta_j dtheta_k
_ROWS = 2 + 3 * N_UNIQ      # = 32  -> exactly 4 full (8,128) f32 tiles
_OUT_ROWS = 16              # [nll, 10 unique H entries, 5 pad] -> 2 full tiles


def _higgs_kernel(slab_ref, out_ref):
    lam = slab_ref[0:1, :]                                  # (1, N)
    n = slab_ref[1:2, :]                                    # (1, N)
    ja = slab_ref[2:2 + N_UNIQ, :]                          # (10, N)
    jb = slab_ref[2 + N_UNIQ:2 + 2 * N_UNIQ, :]             # (10, N)
    hu = slab_ref[2 + 2 * N_UNIQ:2 + 3 * N_UNIQ, :]         # (10, N)

    # EUP approximate reciprocal (~1e-4 rel err, well inside tolerance).
    inv_lam = pl.reciprocal(lam, approx=True)
    w = n * inv_lam * inv_lam                               # (1, N)
    v = 1.0 - n * inv_lam                                   # (1, N)

    # Poisson NLL per bin: lam - n*log(lam)
    # (parameter-independent lgamma(n+1) constant is added in the wrapper).
    nll_row = lam - n * jnp.log(lam)                        # (1, N)

    # Fused Gauss-Newton + curvature terms for the 10 unique H entries.
    terms = w * (ja * jb) + v * hu                          # (10, N)

    pad = jnp.zeros((_OUT_ROWS - 1 - N_UNIQ, nll_row.shape[1]), jnp.float32)
    packed = jnp.concatenate([nll_row, terms, pad], axis=0)  # (16, N)
    sums = jnp.sum(packed, axis=-1, keepdims=True)           # (16, 1), XLU reduce
    # Lane-broadcast so the single output store is full-width / unmasked.
    out_ref[...] = jnp.broadcast_to(sums, out_ref.shape)


def _normal_nll(x, loc, std):
    return 0.5 * jnp.log(2.0 * jnp.pi) + jnp.log(std) + 0.5 * ((x - loc) / std) ** 2


class HiggsLoss:
    def __init__(self):
        self.constraints = {'tes': (TES_LOC, TES_STD),
                            'jes': (JES_LOC, JES_STD),
                            'les': (LES_LOC, LES_STD)}
        # Parameter-independent sum(lgamma(target+1)), cached per target object
        # so it is not re-dispatched on every call.
        self._lgamma_cache = {}
        self._mirror_idx = jnp.array(_MIRROR, jnp.int32)
        self._h_constraints = jnp.diag(jnp.array(
            [0.0, 1.0 / TES_STD ** 2, 1.0 / JES_STD ** 2, 1.0 / LES_STD ** 2],
            jnp.float32))

    def constraints_nll(self, params):
        nll = 0.0
        for name, (loc, std) in self.constraints.items():
            if name in params:
                nll = nll + _normal_nll(jnp.asarray(params[name], jnp.float32), loc, std)
        return nll

    def _lgamma_sum(self, target):
        key = id(target)
        if key not in self._lgamma_cache:
            self._lgamma_cache[key] = jnp.sum(
                lax.lgamma(target.astype(jnp.float32) + 1.0))
        return self._lgamma_cache[key]

    def __call__(self, summary_fn, target, params):
        theta = jnp.stack([jnp.asarray(params[k], jnp.float32)
                           for k in ('mu', 'tes', 'jes', 'les')])
        # `input` and its derivatives w.r.t. the params (glue, plain JAX; this
        # replaces torch's implicit autograd link from `input` to the params).
        lam = summary_fn(theta).astype(jnp.float32)                            # (N,)
        jac = jax.jacfwd(summary_fn)(theta).astype(jnp.float32)                # (N, P)
        lam_hess = jax.jacfwd(jax.jacfwd(summary_fn))(theta).astype(jnp.float32)  # (N, P, P)

        n_bins = lam.shape[0]
        jac_t = jnp.transpose(jac)                                  # (P, N)
        ja = jac_t[jnp.array(_J_IDX)]                               # (10, N)
        jb = jac_t[jnp.array(_K_IDX)]                               # (10, N)
        hu = jnp.stack([lam_hess[:, j, k] for j, k in _PAIRS], axis=0)  # (10, N)

        slab = jnp.concatenate(
            [lam[None], target.astype(jnp.float32)[None], ja, jb, hu],
            axis=0)                                                 # (32, N)

        vmem = pl.BlockSpec(memory_space=pltpu.MemorySpace.VMEM)
        out = pl.pallas_call(
            _higgs_kernel,
            out_shape=jax.ShapeDtypeStruct((_OUT_ROWS, n_bins), jnp.float32),
            in_specs=[vmem],
            out_specs=vmem,
            cost_estimate=pl.CostEstimate(
                flops=8 * _OUT_ROWS * n_bins,
                transcendentals=2 * n_bins,
                bytes_accessed=4 * (_ROWS + _OUT_ROWS) * n_bins),
        )(slab)

        res = out[:, 0]
        nll_pois = res[0]
        h_pois = res[1:1 + N_UNIQ][self._mirror_idx]        # symmetric (4, 4)
        h = h_pois + self._h_constraints

        # Full NLL (matches torch: -sum Poisson.log_prob(target) + constraints).
        nll = nll_pois + self._lgamma_sum(target) + self.constraints_nll(params)

        h_inverse = jnp.linalg.inv(h)   # 4x4 — plain JAX glue
        loss = h_inverse[0, 0]
        return loss, nll, h


if __name__ == "__main__":
    key = jax.random.PRNGKey(0)
    k1, k2, k3, k4 = jax.random.split(key, 4)

    # Deterministic synthetic summary model: expected counts per bin as a
    # smooth function of theta = [mu, tes, jes, les] (stands in for the torch
    # autograd graph that links `input` to the params upstream of HiggsLoss).
    s = 50.0 + 50.0 * jax.random.uniform(k1, (N_BINS,), jnp.float32)
    bkg = 200.0 + 100.0 * jax.random.uniform(k2, (N_BINS,), jnp.float32)
    a = 0.5 * jax.random.normal(k3, (N_BINS, 3), jnp.float32)
    c = 0.5 * jax.random.normal(k4, (N_BINS, 3), jnp.float32)

    def summary_fn(theta):
        mu = theta[0]
        nuis = theta[1:4] - 1.0
        sig = mu * s * jnp.exp(a @ nuis)
        bg = bkg * jnp.exp(c @ nuis)
        return sig + bg

    theta_nominal = jnp.ones((P,), jnp.float32)
    target = summary_fn(theta_nominal)          # Asimov (expected) counts

    params = {'mu': 1.2, 'tes': 1.03, 'jes': 0.97, 'les': 1.01}

    loss_module = HiggsLoss()
    loss, nll, h = loss_module(summary_fn, target, params)
    loss = jax.block_until_ready(loss)

    # Reference: jax.hessian of the pure-JAX NLL (mirrors torch autograd hessian).
    def nll_fn(theta):
        lam = summary_fn(theta)
        pois = jnp.sum(lam - target * jnp.log(lam) + lax.lgamma(target + 1.0))
        cons = (_normal_nll(theta[1], TES_LOC, TES_STD)
                + _normal_nll(theta[2], JES_LOC, JES_STD)
                + _normal_nll(theta[3], LES_LOC, LES_STD))
        return pois + cons

    theta = jnp.array([params['mu'], params['tes'], params['jes'], params['les']],
                      jnp.float32)
    h_ref = jax.hessian(nll_fn)(theta)
    loss_ref = jnp.linalg.inv(h_ref)[0, 0]
    nll_ref = nll_fn(theta)

    assert jnp.allclose(h, h_ref, rtol=1e-2, atol=1e-2), (h, h_ref)
    assert jnp.allclose(loss, loss_ref, rtol=2e-2, atol=1e-6), (loss, loss_ref)
    assert jnp.allclose(nll, nll_ref, rtol=1e-3, atol=1e-3), (nll, nll_ref)
    print("KERNEL_OK")
</pallas_src>

<mosaic_0001>
module attributes {stable_mosaic.version = 11 : i64} {
  func.func @_higgs_kernel(%arg0: memref<32x128xf32, #tpu.memory_space<vmem>>, %arg1: memref<16x128xf32, #tpu.memory_space<vmem>>) attributes {dimension_semantics = [], scalar_prefetch = 0 : i64, scratch_operands = 0 : i64, tpu.core_type = #tpu.core_type<tc>} {
    %c0 = arith.constant 0 : index
    %c0_0 = arith.constant 0 : index
    %0 = vector.load %arg0[%c0, %c0_0] : memref<32x128xf32, #tpu.memory_space<vmem>>, vector<1x128xf32>
    %c1 = arith.constant 1 : index
    %c0_1 = arith.constant 0 : index
    %1 = vector.load %arg0[%c1, %c0_1] : memref<32x128xf32, #tpu.memory_space<vmem>>, vector<1x128xf32>
    %c2 = arith.constant 2 : index
    %c0_2 = arith.constant 0 : index
    %2 = vector.load %arg0[%c2, %c0_2] : memref<32x128xf32, #tpu.memory_space<vmem>>, vector<10x128xf32>
    %c12 = arith.constant 12 : index
    %c0_3 = arith.constant 0 : index
    %3 = vector.load %arg0[%c12, %c0_3] : memref<32x128xf32, #tpu.memory_space<vmem>>, vector<10x128xf32>
    %c22 = arith.constant 22 : index
    %c0_4 = arith.constant 0 : index
    %4 = vector.load %arg0[%c22, %c0_4] : memref<32x128xf32, #tpu.memory_space<vmem>>, vector<10x128xf32>
    %5 = tpu.reciprocal %0 {approx = true} : vector<1x128xf32> -> vector<1x128xf32>
    %6 = arith.mulf %1, %5 : vector<1x128xf32>
    %7 = arith.mulf %6, %5 : vector<1x128xf32>
    %8 = arith.mulf %1, %5 : vector<1x128xf32>
    %cst = arith.constant 1.000000e+00 : f32
    %9 = vector.broadcast %cst : f32 to vector<1x128xf32>
    %10 = arith.subf %9, %8 : vector<1x128xf32>
    %11 = math.log %0 : vector<1x128xf32>
    %12 = arith.mulf %1, %11 : vector<1x128xf32>
    %13 = arith.subf %0, %12 : vector<1x128xf32>
    %14 = arith.mulf %2, %3 : vector<10x128xf32>
    %15 = vector.broadcast %7 : vector<1x128xf32> to vector<10x128xf32>
    %16 = arith.mulf %15, %14 : vector<10x128xf32>
    %17 = vector.broadcast %10 : vector<1x128xf32> to vector<10x128xf32>
    %18 = arith.mulf %17, %4 : vector<10x128xf32>
    %19 = arith.addf %16, %18 : vector<10x128xf32>
    %cst_5 = arith.constant 0.000000e+00 : f32
    %20 = vector.broadcast %cst_5 : f32 to vector<5x128xf32>
    %21 = tpu.concatenate %13, %19, %20 in 0 : vector<1x128xf32>, vector<10x128xf32>, vector<5x128xf32> -> vector<16x128xf32>
    %cst_6 = arith.constant dense<0.000000e+00> : vector<16xf32>
    %22 = vector.multi_reduction <add>, %21, %cst_6 [1] : vector<16x128xf32> to vector<16xf32>
    %23 = vector.shape_cast %22 : vector<16xf32> to vector<16x1xf32>
    %24 = vector.shape_cast %23 : vector<16x1xf32> to vector<16x1xf32>
    %25 = vector.broadcast %24 : vector<16x1xf32> to vector<16x128xf32>
    %c0_7 = arith.constant 0 : index
    %c0_8 = arith.constant 0 : index
    %26 = vector.load %arg1[%c0_7, %c0_8] : memref<16x128xf32, #tpu.memory_space<vmem>>, vector<16x128xf32>
    tpu.vector_store %arg1[%c0_7, %c0_8], %25 {strides = array<i32>} : memref<16x128xf32, #tpu.memory_space<vmem>>, vector<16x128xf32>,
    return
  }
}

</mosaic_0001>

<llo_original>
// kernel: tpu_custom_call.1
$region0: #{tpu_custom_call.1}
  #allocation0 [shape = 'u32[]', space=smem, size = 0x4, offset = 0x4, fixed_abs, tag = 'smem constant byte address 0x4 - core index']
  #allocation1 [shape = 'u32[144,128]{1,0:T(1,128)}', space=vmem, size = 0x12000, scoped, tag = 'internal scratch']
  %s0 = inlined_call_operand.hbm [shape: f32[32,128], index: 0, kind: input, shape index: {}]
  %s1 = inlined_call_operand.hbm [shape: f32[16,128], index: 1, kind: output, shape index: {}]
  %s2 = sld [smem:[#allocation0]]
  $region18: #{tpu_custom_call.1} parent=0
    _
  %s4 = ssub.s32 1, %s2
  %s5 = scalar_select 0, %s4, %s2
  $region1: #{tpu_custom_call.1} parent=0
    #allocation2 [shape = 'u8[16384]{0}', space=vmem, size = 0x4000, scoped, tag = 'input window, operand 0, single buffered']
    #allocation3 [shape = 's32[1]{0}', space=sflag, size = 0x4, scoped, tag = 'scoped memory for tpu_custom_call.1']
    #allocation4 [shape = 's32[1]{0}', space=sflag, size = 0x4, scoped, tag = 'scoped memory for tpu_custom_call.1']
    #allocation5 [shape = 'u8[8192]{0}', space=vmem, size = 0x2000, scoped, tag = 'output window, operand 0, single buffered']
    %6 = vsyncpa [#allocation3], 0
    %7 = vsyncpa [#allocation4], 0
    // Predicated region
    $region2: #{tpu_custom_call.1} parent=1 // pred_check
      _
    $region3: #{tpu_custom_call.1} parent=1 // pred_check_branch
      %9 = sbr.rel (0) target = $region5
    $region4: #{tpu_custom_call.1} parent=1 // pred_region
      %s11 = ssub.s32 512, 512
      %12 = vsyncadd [#allocation3], %s11
      %s13 = sshll.u32 [#allocation2], 4
      %s14 = int_to_ptr.vmem [resolvable:$true] %s13
      %19 = dma.hbm_to_vmem [thread:$0]  %s0, 512, %s14, [#allocation3], 128, 128, 8
    $region5: #{tpu_custom_call.1} parent=1 // pred_fallthru
      _
    // Predicated region
    $region6: #{tpu_custom_call.1} parent=1 // pred_check
      _
    $region7: #{tpu_custom_call.1} parent=1 // pred_check_branch
      %21 = sbr.rel (0) target = $region9
    $region8: #{tpu_custom_call.1} parent=1 // pred_region
      %22 = dma.done [#allocation3], 512
    $region9: #{tpu_custom_call.1} parent=1 // pred_fallthru
      _
    %v23 = vld [vmem:[#allocation2] sm:$0x1]
    %v24 = vld [vmem:[#allocation2 + $0x1] sm:$0x1]
    %v25 = vld [vmem:[#allocation2 + $0x2] sm:$0xff]
    %v26 = vld [vmem:[#allocation2 + $0xa] sm:$0x3]
    %v27 = vld [vmem:[#allocation2 + $0xc] sm:$0xff]
    %v28 = vld [vmem:[#allocation2 + $0x14] sm:$0x3]
    %v29 = vld [vmem:[#allocation2 + $0x16] sm:$0xff]
    %v30 = vld [vmem:[#allocation2 + $0x1e] sm:$0x3]
    %v31 = vrcp.pop %v23
    %v32 = vmul.f32 %v24, %v31
    %v33 = vmul.f32 %v32, %v31
    %v34 = vsub.f32 1.0, %v32
    %v35 = vlog2.pop %v23
    %v36 = vmul.f32 %v35, 0.6931472
    %v37 = vmul.f32 %v24, %v36
    %v38 = vsub.f32 %v23, %v37
    %v39 = vmul.f32 %v25, %v27
    %v40 = vmul.f32 %v26, %v28
    %v41 = vlaneseq
    %v42 = vshrl.u32 %v41, 7
    %v43 = vsub.s32 0, %v42
    %v44 = vrot.slane %v33, %v43
    %v45 = vmul.f32 %v44, %v39
    %v46 = vmul.f32 %v44, %v40
    %v47 = vlaneseq
    %v48 = vshrl.u32 %v47, 7
    %v49 = vsub.s32 0, %v48
    %v50 = vrot.slane %v34, %v49
    %v51 = vmul.f32 %v50, %v29
    %v52 = vmul.f32 %v50, %v30
    %v53 = vadd.f32 %v45, %v51
    %v54 = vadd.f32 %v46, %v52
    %vm57 = vcmask 1040384
    %v58 = vrot.slane %v53, 7
    %v59 = vrot.slane %v54, 7
    %v60 = vsel %vm57, %v58, %v59
    %v63 = vsel %vm57, %v38, %v58
    %vm64 = vcmask 1042432
    %v65 = vsel %vm64, %v60, 0.0
    %66 = vadd.xlane.f32.xlu0 %v63
    %v67 = vpop.xlane.xlu0 %66
    %68 = vadd.xlane.f32.xlu0 %v65
    %v69 = vpop.xlane.xlu0 %68
    %70 = vst [vmem:[#allocation5] sm:$0xff] %v67
    %71 = vst [vmem:[#allocation5 + $0x8] sm:$0xff] %v69
    // Predicated region
    $region10: #{tpu_custom_call.1} parent=1 // pred_check
      _
    $region11: #{tpu_custom_call.1} parent=1 // pred_check_branch
      %73 = sbr.rel (0) target = $region13
    $region12: #{tpu_custom_call.1} parent=1 // pred_region
      %s75 = ssub.s32 256, 256
      %76 = vsyncadd [#allocation4], %s75
      %s77 = sshll.u32 [#allocation5], 4
      %s78 = int_to_ptr.vmem [resolvable:$true] %s77
      %83 = dma.vmem_to_hbm [thread:$0]  %s78, 256, %s1, [#allocation4], 128, 128, 8
    $region13: #{tpu_custom_call.1} parent=1 // pred_fallthru
      _
    // Predicated region
    $region14: #{tpu_custom_call.1} parent=1 // pred_check
      _
    $region15: #{tpu_custom_call.1} parent=1 // pred_check_branch
      %85 = sbr.rel (0) target = $region17
    $region16: #{tpu_custom_call.1} parent=1 // pred_region
      %86 = dma.done [#allocation4], 256
    $region17: #{tpu_custom_call.1} parent=1 // pred_fallthru
      _
    %87 = vsyncpa [#allocation3], 1
    %88 = vsyncpa [#allocation4], 1

</llo_original>
